<compile_context>
chip_gen: v7x
topology: tpu7x:2x2x1
jax: 0.10.0
libtpu: 0.0.40
codegen_flags: <defaults>
</compile_context>

<pallas_src>
import functools

import jax
import jax.numpy as jnp
from jax.experimental import pallas as pl
from jax.experimental.pallas import tpu as pltpu

STATE_DIM = 15
ACTION_DIM = 3
IN_DIM = STATE_DIM + ACTION_DIM          # 18 (contiguous row width of x)
DEFAULT_TILE_B = 8192                    # amortizes ~0.35 us per-grid-step cost
MAX_TILE_B = 16384                       # keeps VMEM within v5e's 16 MiB default


def _bc_loss_kernel(x_ref, w1_ref, b1_ref, w2_ref, b2_ref, w3_ref, b3_ref,
                    out_ref, *, n_valid, tile_b, masked, matmul_dtype):
    x = x_ref[...]                                            # (tile, 18) f32

    def mm(act, w_ref):
        # bf16 (or f32) MXU inputs, f32 accumulation.
        return jnp.dot(act.astype(matmul_dtype), w_ref[...],
                       preferred_element_type=jnp.float32)

    # w1 is zero-padded over the target lanes, so this equals linear1(state).
    h1 = jnp.tanh(mm(x, w1_ref) + b1_ref[...])                # (tile, H)  f32
    h2 = jnp.tanh(mm(h1, w2_ref) + b2_ref[...])               # (tile, H)  f32
    # w3/b3 padded to width 18: lanes 15..17 hold the real action prediction.
    pred = mm(h2, w3_ref) + b3_ref[...]                       # (tile, 18) f32
    # (Optional further tuning: bf16 tanh on v6e/v7x when EUP-bound; kept in
    #  f32 here for accuracy parity with the PyTorch module.)

    diff = pred - x                     # lanes 15..17 == a_pred - a_target
    lane = jax.lax.broadcasted_iota(jnp.int32, diff.shape, 1)
    valid = lane >= STATE_DIM           # drop the 15 state lanes
    if masked:  # static: emitted only when B % tile != 0 (ragged last block)
        row = (pl.program_id(0) * tile_b
               + jax.lax.broadcasted_iota(jnp.int32, diff.shape, 0))
        valid = jnp.logical_and(valid, row < n_valid)
    diff = jnp.where(valid, diff, 0.0)  # select, so OOB garbage/NaN can't leak

    # Per-tile partial sum of squared errors (distinct output block per step).
    out_ref[...] = jnp.sum(diff * diff, keepdims=True).reshape(1, 1, 1)


@functools.partial(jax.jit, static_argnames=("matmul_dtype", "tile_b"))
def bc_forward(x, params, *, matmul_dtype=jnp.float32, tile_b=DEFAULT_TILE_B):
    """Scalar MSE loss of the BC module, computed with one Pallas kernel."""
    w1, b1, w2, b2, w3, b3 = params
    hidden = w1.shape[1]
    n = x.shape[0]
    assert x.shape[1] == IN_DIM

    # One-time (few-KB) weight padding so the kernel needs no lane slicing.
    w1p = jnp.zeros((IN_DIM, hidden), jnp.float32).at[:STATE_DIM, :].set(w1)
    w3p = jnp.zeros((hidden, IN_DIM), jnp.float32).at[:, STATE_DIM:].set(w3)
    b3p = jnp.zeros((1, IN_DIM), jnp.float32).at[:, STATE_DIM:].set(b3)

    w1m = w1p.astype(matmul_dtype)
    w2m = w2.astype(matmul_dtype)
    w3m = w3p.astype(matmul_dtype)

    # Batch tile: whole batch in one block when it fits, otherwise 8-row-
    # aligned tiles of at most MAX_TILE_B rows; ragged last tile is masked.
    tb = max(8, (min(int(tile_b), MAX_TILE_B) // 8) * 8)
    tile = n if n <= tb else tb
    num_tiles = -(-n // tile)
    masked = (n % tile) != 0

    kernel = functools.partial(
        _bc_loss_kernel, n_valid=n, tile_b=tile, masked=masked,
        matmul_dtype=matmul_dtype)

    grid_spec = pltpu.PrefetchScalarGridSpec(
        num_scalar_prefetch=0,
        grid=(num_tiles,),
        in_specs=[
            # Streamed per-tile rows of x (single contiguous input).
            pl.BlockSpec((tile, IN_DIM), lambda i: (i, 0)),
            # Weights / biases: constant block index => resident in VMEM.
            pl.BlockSpec((IN_DIM, hidden), lambda i: (0, 0)),
            pl.BlockSpec((1, hidden), lambda i: (0, 0)),
            pl.BlockSpec((hidden, hidden), lambda i: (0, 0)),
            pl.BlockSpec((1, hidden), lambda i: (0, 0)),
            pl.BlockSpec((hidden, IN_DIM), lambda i: (0, 0)),
            pl.BlockSpec((1, IN_DIM), lambda i: (0, 0)),
        ],
        # One independent partial-sum block per grid step -> "parallel" axis.
        out_specs=pl.BlockSpec((1, 1, 1), lambda i: (i, 0, 0)),
    )

    w_elems = IN_DIM * hidden + hidden * hidden + hidden * IN_DIM
    cost = pl.CostEstimate(
        flops=2 * num_tiles * tile * w_elems,
        transcendentals=2 * num_tiles * tile * hidden,
        bytes_accessed=(n * IN_DIM * 4
                        + w_elems * jnp.dtype(matmul_dtype).itemsize
                        + (2 * hidden + IN_DIM) * 4 + num_tiles * 4),
    )

    partials = pl.pallas_call(
        kernel,
        out_shape=jax.ShapeDtypeStruct((num_tiles, 1, 1), jnp.float32),
        grid_spec=grid_spec,
        compiler_params=pltpu.CompilerParams(
            dimension_semantics=("parallel",)),   # v7x: shard tiles over 2 TCs
        cost_estimate=cost,
    )(x, w1m, b1, w2m, b2, w3m, b3p)

    # Tiny finalize: tree-sum the per-tile partials and take the mean.
    return jnp.sum(partials) * (1.0 / (n * ACTION_DIM))


def init_bc_params(key, hidden_dim):
    """Deterministic init mimicking nn.Linear defaults U(-1/sqrt(fan_in), ..)."""
    def linear(key, fan_in, fan_out):
        kw, kb = jax.random.split(key)
        bound = 1.0 / jnp.sqrt(fan_in)
        w = jax.random.uniform(kw, (fan_in, fan_out), jnp.float32,
                               minval=-bound, maxval=bound)
        b = jax.random.uniform(kb, (1, fan_out), jnp.float32,
                               minval=-bound, maxval=bound)
        return w, b

    k1, k2, k3 = jax.random.split(key, 3)
    w1, b1 = linear(k1, STATE_DIM, hidden_dim)
    w2, b2 = linear(k2, hidden_dim, hidden_dim)
    w3, b3 = linear(k3, hidden_dim, ACTION_DIM)
    return (w1, b1, w2, b2, w3, b3)


def bc_forward_ref(x, params, matmul_dtype=jnp.float32):
    """Pure-JAX reference (optionally emulating bf16 matmul inputs)."""
    w1, b1, w2, b2, w3, b3 = params
    state = x[:, :STATE_DIM]
    a_target = x[:, -ACTION_DIM:]

    def mm(a, w):
        return jnp.dot(a.astype(matmul_dtype), w.astype(matmul_dtype),
                       preferred_element_type=jnp.float32)

    h1 = jnp.tanh(mm(state, w1) + b1)
    h2 = jnp.tanh(mm(h1, w2) + b2)
    a_pred = mm(h2, w3) + b3
    return jnp.mean((a_pred - a_target) ** 2)


if __name__ == "__main__":
    hidden_dim = 32
    key = jax.random.PRNGKey(0)
    k_params, k_x = jax.random.split(key)
    params = init_bc_params(k_params, hidden_dim)

    # Exercise: tiny single-block, medium single-block, exact-tile, ragged
    # multi-tile grid.
    for batch in (5, 600, 8192, 10000):
        kx = jax.random.fold_in(k_x, batch)
        x = jax.random.normal(kx, (batch, IN_DIM), jnp.float32)

        ref_f32 = bc_forward_ref(x, params)

        # Default f32 path (faithful to the PyTorch f32 module).
        loss_f32 = jax.block_until_ready(bc_forward(x, params))
        assert jnp.allclose(loss_f32, ref_f32, rtol=1e-4, atol=1e-6), (
            batch, loss_f32, ref_f32)

        # bf16-MXU path: tight check vs a bf16 reference, relaxed vs true f32.
        loss_bf16 = jax.block_until_ready(
            bc_forward(x, params, matmul_dtype=jnp.bfloat16))
        ref_bf16 = bc_forward_ref(x, params, matmul_dtype=jnp.bfloat16)
        assert jnp.allclose(loss_bf16, ref_bf16, rtol=1e-3, atol=1e-4), (
            batch, loss_bf16, ref_bf16)
        assert jnp.allclose(loss_bf16, ref_f32, rtol=2e-2, atol=2e-3), (
            batch, loss_bf16, ref_f32)

    print("KERNEL_OK")
</pallas_src>

<mosaic_0001>
module attributes {stable_mosaic.version = 11 : i64} {
  func.func @_bc_loss_kernel(%arg0: i32, %arg1: memref<5x18xf32, #tpu.memory_space<vmem>>, %arg2: memref<18x32xf32, #tpu.memory_space<vmem>>, %arg3: memref<1x32xf32, #tpu.memory_space<vmem>>, %arg4: memref<32x32xf32, #tpu.memory_space<vmem>>, %arg5: memref<1x32xf32, #tpu.memory_space<vmem>>, %arg6: memref<32x18xf32, #tpu.memory_space<vmem>>, %arg7: memref<1x18xf32, #tpu.memory_space<vmem>>, %arg8: memref<1x1x1xf32, #tpu.memory_space<vmem>>) attributes {dimension_semantics = [#tpu.dimension_semantics<parallel>], iteration_bounds = array<i64: 1>, scalar_prefetch = 0 : i64, scratch_operands = 0 : i64, tpu.core_type = #tpu.core_type<tc>, window_params = [{transform_indices = @transform_0, window_bounds = array<i64: 5, 18>}, {pipeline_mode = #tpu.pipeline_mode<synchronous>, transform_indices = @transform_1, window_bounds = array<i64: 18, 32>}, {pipeline_mode = #tpu.pipeline_mode<synchronous>, transform_indices = @transform_2, window_bounds = array<i64: 1, 32>}, {pipeline_mode = #tpu.pipeline_mode<synchronous>, transform_indices = @transform_3, window_bounds = array<i64: 32, 32>}, {pipeline_mode = #tpu.pipeline_mode<synchronous>, transform_indices = @transform_4, window_bounds = array<i64: 1, 32>}, {pipeline_mode = #tpu.pipeline_mode<synchronous>, transform_indices = @transform_5, window_bounds = array<i64: 32, 18>}, {pipeline_mode = #tpu.pipeline_mode<synchronous>, transform_indices = @transform_6, window_bounds = array<i64: 1, 18>}, {transform_indices = @transform_7, window_bounds = array<i64: 1, 1, 1>}]} {
    %c0 = arith.constant 0 : index
    %c0_0 = arith.constant 0 : index
    %0 = vector.load %arg1[%c0, %c0_0] : memref<5x18xf32, #tpu.memory_space<vmem>>, vector<5x18xf32>
    %c0_1 = arith.constant 0 : index
    %c0_2 = arith.constant 0 : index
    %1 = vector.load %arg2[%c0_1, %c0_2] : memref<18x32xf32, #tpu.memory_space<vmem>>, vector<18x32xf32>
    %cst = arith.constant dense<0.000000e+00> : vector<5x32xf32>
    %2 = tpu.matmul %0, %1, %cst {dimension_numbers = #tpu.dot_dimension_numbers<[1], [0], [0], [1], [0, 0, 1, 1], [], []>} : vector<5x18xf32>, vector<18x32xf32>, vector<5x32xf32> -> vector<5x32xf32>
    %c0_3 = arith.constant 0 : index
    %c0_4 = arith.constant 0 : index
    %3 = vector.load %arg3[%c0_3, %c0_4] : memref<1x32xf32, #tpu.memory_space<vmem>>, vector<1x32xf32>
    %4 = vector.broadcast %3 : vector<1x32xf32> to vector<5x32xf32>
    %5 = arith.addf %2, %4 : vector<5x32xf32>
    %6 = math.tanh %5 : vector<5x32xf32>
    %c0_5 = arith.constant 0 : index
    %c0_6 = arith.constant 0 : index
    %7 = vector.load %arg4[%c0_5, %c0_6] : memref<32x32xf32, #tpu.memory_space<vmem>>, vector<32x32xf32>
    %cst_7 = arith.constant dense<0.000000e+00> : vector<5x32xf32>
    %8 = tpu.matmul %6, %7, %cst_7 {dimension_numbers = #tpu.dot_dimension_numbers<[1], [0], [0], [1], [0, 0, 1, 1], [], []>} : vector<5x32xf32>, vector<32x32xf32>, vector<5x32xf32> -> vector<5x32xf32>
    %c0_8 = arith.constant 0 : index
    %c0_9 = arith.constant 0 : index
    %9 = vector.load %arg5[%c0_8, %c0_9] : memref<1x32xf32, #tpu.memory_space<vmem>>, vector<1x32xf32>
    %10 = vector.broadcast %9 : vector<1x32xf32> to vector<5x32xf32>
    %11 = arith.addf %8, %10 : vector<5x32xf32>
    %12 = math.tanh %11 : vector<5x32xf32>
    %c0_10 = arith.constant 0 : index
    %c0_11 = arith.constant 0 : index
    %13 = vector.load %arg6[%c0_10, %c0_11] : memref<32x18xf32, #tpu.memory_space<vmem>>, vector<32x18xf32>
    %cst_12 = arith.constant dense<0.000000e+00> : vector<5x18xf32>
    %14 = tpu.matmul %12, %13, %cst_12 {dimension_numbers = #tpu.dot_dimension_numbers<[1], [0], [0], [1], [0, 0, 1, 1], [], []>} : vector<5x32xf32>, vector<32x18xf32>, vector<5x18xf32> -> vector<5x18xf32>
    %c0_13 = arith.constant 0 : index
    %c0_14 = arith.constant 0 : index
    %15 = vector.load %arg7[%c0_13, %c0_14] : memref<1x18xf32, #tpu.memory_space<vmem>>, vector<1x18xf32>
    %16 = vector.broadcast %15 : vector<1x18xf32> to vector<5x18xf32>
    %17 = arith.addf %14, %16 : vector<5x18xf32>
    %18 = arith.subf %17, %0 : vector<5x18xf32>
    %19 = tpu.iota {dimensions = array<i32: 1>} : vector<5x18xi32>
    %c15_i32 = arith.constant 15 : i32
    %20 = vector.broadcast %c15_i32 : i32 to vector<5x18xi32>
    %21 = arith.cmpi sge, %19, %20 : vector<5x18xi32>
    %cst_15 = arith.constant 0.000000e+00 : f32
    %22 = vector.broadcast %cst_15 : f32 to vector<5x18xf32>
    %23 = arith.select %21, %18, %22 : vector<5x18xi1>, vector<5x18xf32>
    %24 = arith.mulf %23, %23 : vector<5x18xf32>
    %25 = vector.shape_cast %24 : vector<5x18xf32> to vector<1x5x18xf32>
    %cst_16 = arith.constant dense<0.000000e+00> : vector<1xf32>
    %26 = vector.multi_reduction <add>, %25, %cst_16 [1, 2] : vector<1x5x18xf32> to vector<1xf32>
    %27 = vector.shape_cast %26 : vector<1xf32> to vector<1x1x1xf32>
    %28 = vector.extract %27[0, 0, 0] : f32 from vector<1x1x1xf32>
    %29 = vector.broadcast %28 : f32 to vector<1x1xf32>
    %30 = vector.shape_cast %29 : vector<1x1xf32> to vector<1x1x1xf32>
    %c0_17 = arith.constant 0 : index
    %c0_18 = arith.constant 0 : index
    %c0_19 = arith.constant 0 : index
    %31 = vector.load %arg8[%c0_17, %c0_18, %c0_19] : memref<1x1x1xf32, #tpu.memory_space<vmem>>, vector<1x1x1xf32>
    tpu.vector_store %arg8[%c0_17, %c0_18, %c0_19], %30 {strides = array<i32>} : memref<1x1x1xf32, #tpu.memory_space<vmem>>, vector<1x1x1xf32>,
    return
  }
  func.func @transform_0(%arg0: i32) -> (i32, i32) {
    %c0_i32 = arith.constant 0 : i32
    %c0_i32_0 = arith.constant 0 : i32
    return %arg0, %c0_i32 : i32, i32
  }
  func.func @transform_1(%arg0: i32) -> (i32, i32) {
    %c0_i32 = arith.constant 0 : i32
    %c0_i32_0 = arith.constant 0 : i32
    %c0_i32_1 = arith.constant 0 : i32
    return %c0_i32, %c0_i32_0 : i32, i32
  }
  func.func @transform_2(%arg0: i32) -> (i32, i32) {
    %c0_i32 = arith.constant 0 : i32
    %c0_i32_0 = arith.constant 0 : i32
    %c0_i32_1 = arith.constant 0 : i32
    return %c0_i32, %c0_i32_0 : i32, i32
  }
  func.func @transform_3(%arg0: i32) -> (i32, i32) {
    %c0_i32 = arith.constant 0 : i32
    %c0_i32_0 = arith.constant 0 : i32
    %c0_i32_1 = arith.constant 0 : i32
    return %c0_i32, %c0_i32_0 : i32, i32
  }
  func.func @transform_4(%arg0: i32) -> (i32, i32) {
    %c0_i32 = arith.constant 0 : i32
    %c0_i32_0 = arith.constant 0 : i32
    %c0_i32_1 = arith.constant 0 : i32
    return %c0_i32, %c0_i32_0 : i32, i32
  }
  func.func @transform_5(%arg0: i32) -> (i32, i32) {
    %c0_i32 = arith.constant 0 : i32
    %c0_i32_0 = arith.constant 0 : i32
    %c0_i32_1 = arith.constant 0 : i32
    return %c0_i32, %c0_i32_0 : i32, i32
  }
  func.func @transform_6(%arg0: i32) -> (i32, i32) {
    %c0_i32 = arith.constant 0 : i32
    %c0_i32_0 = arith.constant 0 : i32
    %c0_i32_1 = arith.constant 0 : i32
    return %c0_i32, %c0_i32_0 : i32, i32
  }
  func.func @transform_7(%arg0: i32) -> (i32, i32, i32) {
    %c0_i32 = arith.constant 0 : i32
    %c0_i32_0 = arith.constant 0 : i32
    %c0_i32_1 = arith.constant 0 : i32
    return %arg0, %c0_i32, %c0_i32_0 : i32, i32, i32
  }
}

</mosaic_0001>

<llo_original>
// kernel: bc_forward.1
$region0: #{bc_forward.1}
  #allocation0 [shape = 'u32[]', space=smem, size = 0x4, offset = 0x4, fixed_abs, tag = 'smem constant byte address 0x4 - core index']
  #allocation1 [shape = 'u32[144,128]{1,0:T(1,128)}', space=vmem, size = 0x12000, scoped, tag = 'internal scratch']
  %s0 = inlined_call_operand.vmem [shape: f32[5,18], index: 0, kind: input, shape index: {}]
  %s1 = inlined_call_operand.vmem [shape: f32[18,32], index: 1, kind: input, shape index: {}]
  %s2 = inlined_call_operand.vmem [shape: f32[1,32], index: 2, kind: input, shape index: {}]
  %s3 = inlined_call_operand.vmem [shape: f32[32,32], index: 3, kind: input, shape index: {}]
  %s4 = inlined_call_operand.vmem [shape: f32[1,32], index: 4, kind: input, shape index: {}]
  %s5 = inlined_call_operand.vmem [shape: f32[32,18], index: 5, kind: input, shape index: {}]
  %s6 = inlined_call_operand.vmem [shape: f32[1,18], index: 6, kind: input, shape index: {}]
  %s7 = inlined_call_operand.hbm [shape: f32[1,1,1], index: 7, kind: output, shape index: {}]
  %s8 = sld [smem:[#allocation0]]
  $region38: #{bc_forward.1} parent=0
    _
  %s10 = ssub.s32 1, %s8
  %s11 = scalar_select 0, %s10, %s8
  $region1: #{bc_forward.1} parent=0
    #allocation2 [shape = 'u8[512]{0}', space=vmem, size = 0x400, scoped, tag = 'output window, operand 0, single buffered']
    #allocation3 [shape = 's32[1]{0}', space=sflag, size = 0x4, scoped, tag = 'scoped memory for bc_forward.1']
    %12 = vsyncpa [#allocation3], 0
    // Predicated region
    $region2: #{bc_forward.1} parent=1 // pred_check
      _
    $region3: #{bc_forward.1} parent=1 // pred_check_branch
      %14 = sbr.rel (0) target = $region5
    $region4: #{bc_forward.1} parent=1 // pred_region
      _
    $region5: #{bc_forward.1} parent=1 // pred_fallthru
      _
    // Predicated region
    $region6: #{bc_forward.1} parent=1 // pred_check
      _
    $region7: #{bc_forward.1} parent=1 // pred_check_branch
      %16 = sbr.rel (0) target = $region9
    $region8: #{bc_forward.1} parent=1 // pred_region
      _
    $region9: #{bc_forward.1} parent=1 // pred_fallthru
      _
    // Predicated region
    $region10: #{bc_forward.1} parent=1 // pred_check
      _
    $region11: #{bc_forward.1} parent=1 // pred_check_branch
      %18 = sbr.rel (0) target = $region13
    $region12: #{bc_forward.1} parent=1 // pred_region
      _
    $region13: #{bc_forward.1} parent=1 // pred_fallthru
      _
    // Predicated region
    $region14: #{bc_forward.1} parent=1 // pred_check
      _
    $region15: #{bc_forward.1} parent=1 // pred_check_branch
      %20 = sbr.rel (0) target = $region17
    $region16: #{bc_forward.1} parent=1 // pred_region
      _
    $region17: #{bc_forward.1} parent=1 // pred_fallthru
      _
    // Predicated region
    $region18: #{bc_forward.1} parent=1 // pred_check
      _
    $region19: #{bc_forward.1} parent=1 // pred_check_branch
      %22 = sbr.rel (0) target = $region21
    $region20: #{bc_forward.1} parent=1 // pred_region
      _
    $region21: #{bc_forward.1} parent=1 // pred_fallthru
      _
    // Predicated region
    $region22: #{bc_forward.1} parent=1 // pred_check
      _
    $region23: #{bc_forward.1} parent=1 // pred_check_branch
      %24 = sbr.rel (0) target = $region25
    $region24: #{bc_forward.1} parent=1 // pred_region
      _
    $region25: #{bc_forward.1} parent=1 // pred_fallthru
      _
    // Predicated region
    $region26: #{bc_forward.1} parent=1 // pred_check
      _
    $region27: #{bc_forward.1} parent=1 // pred_check_branch
      %26 = sbr.rel (0) target = $region29
    $region28: #{bc_forward.1} parent=1 // pred_region
      _
    $region29: #{bc_forward.1} parent=1 // pred_fallthru
      _
    %v27 = vld [vmem:[%s0] sm:$0x1f]
    %v28 = vld [vmem:[%s1] sm:$0xff]
    %v29 = vld [vmem:[%s1 + $0x8] sm:$0xff]
    %v30 = vld [vmem:[%s1 + $0x10] sm:$0x3]
    %v31 = vld [vmem:[%s2] sm:$0x1]
    %v33 = vlaneseq
    %v34 = vshrl.u32 %v33, 7
    %v35 = vsub.s32 0, %v34
    %v36 = vrot.slane %v31, %v35
    %vm38 = vcmask 146432
    %v40 = vsel %vm38, %v27, 0
    %vm42 = vcmask 1041408
    %v44 = vsel %vm42, %v30, 0
    %46 = vmatprep.subr.mxu0 0.0
    %47 = vmatpush1.msra.mxu0 %v28
    %48 = vmatprep.subr.mxu0 0.0
    %49 = vmatpush1.msra.mxu0 %v29
    %50 = vmatprep.subr.mxu0 0.0
    %51 = vmatpush1.msra.mxu0 %v44
    %52 = vmatprep.subr.mxu0 0.0
    %53 = vmatpush1.msra.mxu0 0.0
    %54 = vmatprep.subr.mxu0 0.0
    %55 = vmatpush1.msra.mxu0 0.0
    %56 = vmatprep.subr.mxu0 0.0
    %57 = vmatpush1.msra.mxu0 0.0
    %58 = vmatprep.subr.mxu0 0.0
    %59 = vmatpush1.msra.mxu0 0.0
    %60 = vmatprep.subr.mxu0 0.0
    %61 = vmatpush1.msra.mxu0 0.0
    %62 = vmatprep.subr.mxu0 0.0
    %63 = vmatpush1.msra.mxu0 0.0
    %64 = vmatprep.subr.mxu0 0.0
    %65 = vmatpush1.msra.mxu0 0.0
    %66 = vmatprep.subr.mxu0 0.0
    %67 = vmatpush1.msra.mxu0 0.0
    %68 = vmatprep.subr.mxu0 0.0
    %69 = vmatpush1.msra.mxu0 0.0
    %70 = vmatprep.subr.mxu0 0.0
    %71 = vmatpush1.msra.mxu0 0.0
    %72 = vmatprep.subr.mxu0 0.0
    %73 = vmatpush1.msra.mxu0 0.0
    %74 = vmatprep.subr.mxu0 0.0
    %75 = vmatpush1.msra.mxu0 0.0
    %76 = vmatprep.subr.mxu0 0.0
    %77 = vmatpush1.msra.mxu0 0.0
    %78 = vmatprep.subr.mxu0 0.0
    %79 = vmatpush1.msra.mxu0 0.0
    %80 = vmatprep.subr.mxu0 0.0
    %81 = vmatpush1.msra.mxu0 0.0
    %82 = vmatprep.subr.mxu0 0.0
    %83 = vmatpush1.msra.mxu0 0.0
    %84 = vmatprep.subr.mxu0 0.0
    %85 = vmatpush1.msra.mxu0 0.0
    %86 = vmatprep.subr.mxu0 0.0
    %87 = vmatpush1.msra.mxu0 0.0
    %88 = vmatprep.subr.mxu0 0.0
    %89 = vmatpush1.msra.mxu0 0.0
    %90 = vmatprep.subr.mxu0 0.0
    %91 = vmatpush1.msra.mxu0 0.0
    %92 = vmatprep.subr.mxu0 0.0
    %93 = vmatpush1.msra.mxu0 0.0
    %94 = vmatprep.subr.mxu0 0.0
    %95 = vmatpush1.msra.mxu0 0.0
    %96 = vmatprep.subr.mxu0 0.0
    %97 = vmatpush1.msra.mxu0 0.0
    %98 = vmatprep.subr.mxu0 0.0
    %99 = vmatpush1.msra.mxu0 0.0
    %100 = vmatprep.subr.mxu0 0.0
    %101 = vmatpush1.msra.mxu0 0.0
    %102 = vmatprep.subr.mxu0 0.0
    %103 = vmatpush1.msra.mxu0 0.0
    %104 = vmatprep.subr.mxu0 0.0
    %105 = vmatpush1.msra.mxu0 0.0
    %106 = vmatprep.subr.mxu0 0.0
    %107 = vmatpush1.msra.mxu0 0.0
    %108 = vmatprep.subr.mxu0 0.0
    %109 = vmatpush1.msra.mxu0 0.0
    %110 = vmatprep.mubr.f32.mxu0 0.0
    %111 = vmatmul.mubr.f32.gmra.mrb[0].mxu0 %v40
    %v112 = vpop.f32.mrb[0].mxu0
    %v113 = vadd.f32 %v36, %v112
    %v114 = vpop.f32.mrb[0].mxu0
    %115 = vdwg.mxu0
    %v116 = vtanh.pop %v113
    %v117 = vld [vmem:[%s3] sm:$0xff]
    %v118 = vld [vmem:[%s3 + $0x8] sm:$0xff]
    %v119 = vld [vmem:[%s3 + $0x10] sm:$0xff]
    %v120 = vld [vmem:[%s3 + $0x18] sm:$0xff]
    %v121 = vld [vmem:[%s4] sm:$0x1]
    %v123 = vlaneseq
    %v124 = vshrl.u32 %v123, 7
    %v125 = vsub.s32 0, %v124
    %v126 = vrot.slane %v121, %v125
    %vm128 = vcmask 261120
    %v130 = vsel %vm128, %v116, 0
    %132 = vmatprep.subr.mxu0 0.0
    %133 = vmatpush1.msra.mxu0 %v117
    %134 = vmatprep.subr.mxu0 0.0
    %135 = vmatpush1.msra.mxu0 %v118
    %136 = vmatprep.subr.mxu0 0.0
    %137 = vmatpush1.msra.mxu0 %v119
    %138 = vmatprep.subr.mxu0 0.0
    %139 = vmatpush1.msra.mxu0 %v120
    %140 = vmatprep.subr.mxu0 0.0
    %141 = vmatpush1.msra.mxu0 0.0
    %142 = vmatprep.subr.mxu0 0.0
    %143 = vmatpush1.msra.mxu0 0.0
    %144 = vmatprep.subr.mxu0 0.0
    %145 = vmatpush1.msra.mxu0 0.0
    %146 = vmatprep.subr.mxu0 0.0
    %147 = vmatpush1.msra.mxu0 0.0
    %148 = vmatprep.subr.mxu0 0.0
    %149 = vmatpush1.msra.mxu0 0.0
    %150 = vmatprep.subr.mxu0 0.0
    %151 = vmatpush1.msra.mxu0 0.0
    %152 = vmatprep.subr.mxu0 0.0
    %153 = vmatpush1.msra.mxu0 0.0
    %154 = vmatprep.subr.mxu0 0.0
    %155 = vmatpush1.msra.mxu0 0.0
    %156 = vmatprep.subr.mxu0 0.0
    %157 = vmatpush1.msra.mxu0 0.0
    %158 = vmatprep.subr.mxu0 0.0
    %159 = vmatpush1.msra.mxu0 0.0
    %160 = vmatprep.subr.mxu0 0.0
    %161 = vmatpush1.msra.mxu0 0.0
    %162 = vmatprep.subr.mxu0 0.0
    %163 = vmatpush1.msra.mxu0 0.0
    %164 = vmatprep.subr.mxu0 0.0
    %165 = vmatpush1.msra.mxu0 0.0
    %166 = vmatprep.subr.mxu0 0.0
    %167 = vmatpush1.msra.mxu0 0.0
    %168 = vmatprep.subr.mxu0 0.0
    %169 = vmatpush1.msra.mxu0 0.0
    %170 = vmatprep.subr.mxu0 0.0
    %171 = vmatpush1.msra.mxu0 0.0
    %172 = vmatprep.subr.mxu0 0.0
    %173 = vmatpush1.msra.mxu0 0.0
    %174 = vmatprep.subr.mxu0 0.0
    %175 = vmatpush1.msra.mxu0 0.0
    %176 = vmatprep.subr.mxu0 0.0
    %177 = vmatpush1.msra.mxu0 0.0
    %178 = vmatprep.subr.mxu0 0.0
    %179 = vmatpush1.msra.mxu0 0.0
    %180 = vmatprep.subr.mxu0 0.0
    %181 = vmatpush1.msra.mxu0 0.0
    %182 = vmatprep.subr.mxu0 0.0
    %183 = vmatpush1.msra.mxu0 0.0
    %184 = vmatprep.subr.mxu0 0.0
    %185 = vmatpush1.msra.mxu0 0.0
    %186 = vmatprep.subr.mxu0 0.0
    %187 = vmatpush1.msra.mxu0 0.0
    %188 = vmatprep.subr.mxu0 0.0
    %189 = vmatpush1.msra.mxu0 0.0
    %190 = vmatprep.subr.mxu0 0.0
    %191 = vmatpush1.msra.mxu0 0.0
    %192 = vmatprep.subr.mxu0 0.0
    %193 = vmatpush1.msra.mxu0 0.0
    %194 = vmatprep.subr.mxu0 0.0
    %195 = vmatpush1.msra.mxu0 0.0
    %196 = vmatprep.mubr.f32.mxu0 0.0
    %197 = vmatmul.mubr.f32.gmra.mrb[0].mxu0 %v130
    %v198 = vpop.f32.mrb[0].mxu0
    %v199 = vadd.f32 %v126, %v198
    %v200 = vpop.f32.mrb[0].mxu0
    %201 = vdwg.mxu0
    %v202 = vtanh.pop %v199
    %v203 = vld [vmem:[%s5] sm:$0xff]
    %v204 = vld [vmem:[%s5 + $0x8] sm:$0xff]
    %v205 = vld [vmem:[%s5 + $0x10] sm:$0xff]
    %v206 = vld [vmem:[%s5 + $0x18] sm:$0xff]
    %v207 = vld [vmem:[%s6] sm:$0x1]
    %v209 = vlaneseq
    %v210 = vshrl.u32 %v209, 7
    %v211 = vsub.s32 0, %v210
    %v212 = vrot.slane %v207, %v211
    %v215 = vsel %vm128, %v202, 0
    %217 = vmatprep.subr.mxu0 0.0
    %218 = vmatpush1.msra.mxu0 %v203
    %219 = vmatprep.subr.mxu0 0.0
    %220 = vmatpush1.msra.mxu0 %v204
    %221 = vmatprep.subr.mxu0 0.0
    %222 = vmatpush1.msra.mxu0 %v205
    %223 = vmatprep.subr.mxu0 0.0
    %224 = vmatpush1.msra.mxu0 %v206
    %225 = vmatprep.subr.mxu0 0.0
    %226 = vmatpush1.msra.mxu0 0.0
    %227 = vmatprep.subr.mxu0 0.0
    %228 = vmatpush1.msra.mxu0 0.0
    %229 = vmatprep.subr.mxu0 0.0
    %230 = vmatpush1.msra.mxu0 0.0
    %231 = vmatprep.subr.mxu0 0.0
    %232 = vmatpush1.msra.mxu0 0.0
    %233 = vmatprep.subr.mxu0 0.0
    %234 = vmatpush1.msra.mxu0 0.0
    %235 = vmatprep.subr.mxu0 0.0
    %236 = vmatpush1.msra.mxu0 0.0
    %237 = vmatprep.subr.mxu0 0.0
    %238 = vmatpush1.msra.mxu0 0.0
    %239 = vmatprep.subr.mxu0 0.0
    %240 = vmatpush1.msra.mxu0 0.0
    %241 = vmatprep.subr.mxu0 0.0
    %242 = vmatpush1.msra.mxu0 0.0
    %243 = vmatprep.subr.mxu0 0.0
    %244 = vmatpush1.msra.mxu0 0.0
    %245 = vmatprep.subr.mxu0 0.0
    %246 = vmatpush1.msra.mxu0 0.0
    %247 = vmatprep.subr.mxu0 0.0
    %248 = vmatpush1.msra.mxu0 0.0
    %249 = vmatprep.subr.mxu0 0.0
    %250 = vmatpush1.msra.mxu0 0.0
    %251 = vmatprep.subr.mxu0 0.0
    %252 = vmatpush1.msra.mxu0 0.0
    %253 = vmatprep.subr.mxu0 0.0
    %254 = vmatpush1.msra.mxu0 0.0
    %255 = vmatprep.subr.mxu0 0.0
    %256 = vmatpush1.msra.mxu0 0.0
    %257 = vmatprep.subr.mxu0 0.0
    %258 = vmatpush1.msra.mxu0 0.0
    %259 = vmatprep.subr.mxu0 0.0
    %260 = vmatpush1.msra.mxu0 0.0
    %261 = vmatprep.subr.mxu0 0.0
    %262 = vmatpush1.msra.mxu0 0.0
    %263 = vmatprep.subr.mxu0 0.0
    %264 = vmatpush1.msra.mxu0 0.0
    %265 = vmatprep.subr.mxu0 0.0
    %266 = vmatpush1.msra.mxu0 0.0
    %267 = vmatprep.subr.mxu0 0.0
    %268 = vmatpush1.msra.mxu0 0.0
    %269 = vmatprep.subr.mxu0 0.0
    %270 = vmatpush1.msra.mxu0 0.0
    %271 = vmatprep.subr.mxu0 0.0
    %272 = vmatpush1.msra.mxu0 0.0
    %273 = vmatprep.subr.mxu0 0.0
    %274 = vmatpush1.msra.mxu0 0.0
    %275 = vmatprep.subr.mxu0 0.0
    %276 = vmatpush1.msra.mxu0 0.0
    %277 = vmatprep.subr.mxu0 0.0
    %278 = vmatpush1.msra.mxu0 0.0
    %279 = vmatprep.subr.mxu0 0.0
    %280 = vmatpush1.msra.mxu0 0.0
    %281 = vmatprep.mubr.f32.mxu0 0.0
    %282 = vmatmul.mubr.f32.gmra.mrb[0].mxu0 %v215
    %v283 = vpop.f32.mrb[0].mxu0
    %v284 = vadd.f32 %v212, %v283
    %v285 = vpop.f32.mrb[0].mxu0
    %286 = vdwg.mxu0
    %v287 = vsub.f32 %v284, %v27
    %v288 = vlaneseq
    %v289 = vand.u32 %v288, 127
    %vm290 = vcmp.ge.s32.totalorder %v289, 15
    %v291 = vsel %vm290, %v287, 0.0
    %v292 = vmul.f32 %v291, %v291
    %vm293 = vcmask 143360
    %v294 = vsel %vm293, %v292, 0.0
    %295 = vadd.xlane.f32.xlu0 %v294
    %v296 = vpop.xlane.xlu0 %295
    %v297 = vrot.slane %v296, 4
    %v298 = vadd.f32 %v296, %v297
    %v299 = vrot.slane %v298, 2
    %v300 = vadd.f32 %v298, %v299
    %v301 = vrot.slane %v300, 1
    %v302 = vadd.f32 %v300, %v301
    %s303 = vtos %v302
    %v304 = vstv %s303
    %vm305 = vcmask 0
    %306 = vst.msk [vmem:[#allocation2] sm:$0x1] %vm305, %v304
    // Predicated region
    $region30: #{bc_forward.1} parent=1 // pred_check
      _
    $region31: #{bc_forward.1} parent=1 // pred_check_branch
      %308 = sbr.rel (0) target = $region33
    $region32: #{bc_forward.1} parent=1 // pred_region
      %s310 = ssub.s32 16, 16
      %311 = vsyncadd [#allocation3], %s310
      %s313 = sshll.u32 [#allocation2], 4
      %s314 = int_to_ptr.vmem [resolvable:$true] %s313
      %316 = dma.vmem_to_hbm [thread:$0]  %s314, 16, %s7, [#allocation3]
    $region33: #{bc_forward.1} parent=1 // pred_fallthru
      _
    // Predicated region
    $region34: #{bc_forward.1} parent=1 // pred_check
      _
    $region35: #{bc_forward.1} parent=1 // pred_check_branch
      %318 = sbr.rel (0) target = $region37
    $region36: #{bc_forward.1} parent=1 // pred_region
      %319 = dma.done [#allocation3], 16
    $region37: #{bc_forward.1} parent=1 // pred_fallthru
      _
    %320 = vsyncpa [#allocation3], 1

</llo_original>
